<compile_context>
chip_gen: v7x
topology: tpu7x:2x2x1
jax: 0.10.0
libtpu: 0.0.40
codegen_flags: <defaults>
</compile_context>

<pallas_src>
import jax
import jax.numpy as jnp
from jax.experimental import pallas as pl
from jax.experimental.pallas import tpu as pltpu

_LANES = 128
_SUBLANES = 8
_MAX_TILE_ROWS = 8192                 # row-tile upper cap
_VMEM_BUDGET = 24 * 1024 * 1024       # streamed-tile budget (fits v7x 32 MiB scoped)

# Contract the LAST dim of both operands (A @ B.T). This is the natively
# supported transposed-RHS MXU form (same dimension numbers as flash
# attention's q.kT), so the big streamed tile is never XLU-transposed.
_TRANS_B = (((1,), (1,)), ((), ()))


def _round_up(x, m):
    return ((x + m - 1) // m) * m


# ------------------------------------------------------------------ kernels

def _disc_gemv_kernel(bias_ref, v_ref, hpl_ref, hmi_ref, out_ref):
    """Fast path (single summary row): sc = <h, v> + b.

    v_ref is a tiny resident (8, n_h) block (rows identical). Streamed
    (tile_n, n_h) h tiles are the transposed RHS -> result lands lane-dense
    as (8, tile_n); rows 0 of r1/r2 are written directly to the (2, tile_n)
    lane-dense output block (row 0 = sc1, row 1 = sc2)."""
    b = bias_ref[0]
    v = v_ref[...]
    r1 = jax.lax.dot_general(v, hpl_ref[...], dimension_numbers=_TRANS_B,
                             preferred_element_type=jnp.float32)   # (8, tile_n)
    r2 = jax.lax.dot_general(v, hmi_ref[...], dimension_numbers=_TRANS_B,
                             preferred_element_type=jnp.float32)   # (8, tile_n)
    out_ref[0:1, :] = r1[0:1, :] + b
    out_ref[1:2, :] = r2[0:1, :] + b


def _disc_bilinear_kernel(bias_ref, hpl_ref, hmi_ref, cx_ref, w_ref, out_ref):
    """General path (c has N distinct rows): full per-row bilinear.

    y[n, i] = sum_j c_x[n, j] * W[i, j]  (W consumed untransposed).
    The per-row reduction sum_i h[n,i]*y[n,i] is done with a ones-row MXU
    matmul so the result is produced lane-dense as (1, tile_n) directly
    (no (tile_n, 1) column + relayout, no masked 2-lane stores)."""
    b = bias_ref[0]
    n_h = cx_ref.shape[-1]
    y = jax.lax.dot_general(cx_ref[...], w_ref[...], dimension_numbers=_TRANS_B,
                            preferred_element_type=jnp.float32)     # (tile_n, n_h)
    z1 = hpl_ref[...].astype(jnp.float32) * y
    z2 = hmi_ref[...].astype(jnp.float32) * y
    ones = jnp.ones((_SUBLANES, n_h), jnp.float32)
    s1 = jax.lax.dot_general(ones, z1, dimension_numbers=_TRANS_B,
                             preferred_element_type=jnp.float32)    # (8, tile_n)
    s2 = jax.lax.dot_general(ones, z2, dimension_numbers=_TRANS_B,
                             preferred_element_type=jnp.float32)
    out_ref[0:1, :] = s1[0:1, :] + b
    out_ref[1:2, :] = s2[0:1, :] + b


# ------------------------------------------------------------------ sizing

def _block_phys_bytes(rows, cols, itemsize):
    """Physical VMEM footprint of one (rows, cols) buffer (lane padding to 128,
    sublane padding to 8)."""
    return _round_up(max(rows, 1), _SUBLANES) * _round_up(max(cols, 1), _LANES) * itemsize


def _pick_tile_n(N, n_h, stream_itemsize, n_streams, fixed_bytes, temp_f32_tiles):
    """Row tile: full array for small N (always layout-legal), otherwise a
    multiple of 128 sized to the VMEM budget, capped at 8192 rows and at
    ceil(N/2) (rounded to 128) so the grid has >= 2 steps (v7x megacore and
    DMA/compute overlap)."""
    if N < 256:
        return N
    per128 = (n_streams * 2 * _block_phys_bytes(128, n_h, stream_itemsize)   # double-buffered inputs
              + temp_f32_tiles * _block_phys_bytes(128, n_h, 4)              # in-kernel f32 temps
              + 2 * _block_phys_bytes(2, 128, 4))                            # (2, tile) f32 out x2
    avail = max(_VMEM_BUDGET - fixed_bytes, per128)
    tile = min((avail // per128) * 128, _MAX_TILE_ROWS)
    tile = min(tile, _round_up(pl.cdiv(N, 2), 128))     # >= 2 grid steps (<= N here)
    return max(tile, 128)


def _sanitize_tile(tile_n, N):
    if N < 256:
        return N
    tile_n = max(128, min(int(tile_n), N))
    return (tile_n // 128) * 128


def _vmem_limit_bytes(tile_n, n_h, stream_itemsize, n_streams, fixed_bytes, temp_f32_tiles):
    rows = max(int(tile_n), 1)
    total = (n_streams * 2 * _block_phys_bytes(rows, n_h, stream_itemsize)
             + temp_f32_tiles * _block_phys_bytes(rows, n_h, 4)
             + 2 * _block_phys_bytes(2, max(rows, 128), 4)
             + fixed_bytes)
    return int(min(total + (4 << 20), 64 << 20))        # headroom; <= v7x physical VMEM


# ------------------------------------------------------------------ forward

def discriminator_forward(c, h_pl, h_mi, weight, bias, *, tile_n=None,
                          s_bias1=None, s_bias2=None):
    """Pallas forward of Discriminator.

    c      : (n_h,), (1, n_h) or (N, n_h)   summary vector (expanded like h_pl)
    h_pl   : (N, n_h)   positive embeddings
    h_mi   : (N, n_h)   negative (shuffled) embeddings
    weight : (1, n_h, n_h)  Bilinear weight
    bias   : (1,)           Bilinear bias
    returns logits : (N, 2)  (float32)
    """
    N, n_h = h_pl.shape
    W = weight.reshape(n_h, n_h).astype(jnp.float32)
    b = jnp.reshape(bias, (-1,))[:1].astype(jnp.float32)

    c2 = jnp.reshape(c, (-1, n_h))
    single_summary = (c2.shape[0] == 1)

    if single_summary:
        # ---- fast path: precompute v = W @ c once; stream only h_pl / h_mi.
        stream_dtype = h_pl.dtype
        itemsize = jnp.dtype(stream_dtype).itemsize
        v = W @ c2[0].astype(jnp.float32)                               # (n_h,)
        # Cast v to the streaming dtype so the MXU consumes the h tiles
        # natively (no per-step promotion copies of the big tile).
        v_mat = jnp.broadcast_to(v.reshape(1, n_h),
                                 (_SUBLANES, n_h)).astype(stream_dtype)
        fixed = 2 * _block_phys_bytes(_SUBLANES, n_h, itemsize)         # resident v, x2 buffers

        if tile_n is None:
            tile_n = _pick_tile_n(N, n_h, itemsize, n_streams=2,
                                  fixed_bytes=fixed, temp_f32_tiles=0)
        else:
            tile_n = _sanitize_tile(tile_n, N)
        grid = (pl.cdiv(N, tile_n),)                                    # ragged last block: no padding
        vmem_limit = _vmem_limit_bytes(tile_n, n_h, itemsize, n_streams=2,
                                       fixed_bytes=fixed, temp_f32_tiles=0)

        out = pl.pallas_call(
            _disc_gemv_kernel,
            out_shape=jax.ShapeDtypeStruct((2, N), jnp.float32),
            grid=grid,
            in_specs=[
                pl.BlockSpec(memory_space=pltpu.MemorySpace.SMEM),      # bias (1,)
                pl.BlockSpec((_SUBLANES, n_h), lambda i: (0, 0)),       # v (resident)
                pl.BlockSpec((tile_n, n_h), lambda i: (i, 0)),          # h_pl tile
                pl.BlockSpec((tile_n, n_h), lambda i: (i, 0)),          # h_mi tile
            ],
            out_specs=pl.BlockSpec((2, tile_n), lambda i: (0, i)),      # lane-dense
            compiler_params=pltpu.CompilerParams(
                dimension_semantics=("parallel",),
                vmem_limit_bytes=vmem_limit),
        )(b, v_mat, h_pl.astype(stream_dtype), h_mi.astype(stream_dtype))
    else:
        # ---- general path: c genuinely has N distinct rows.
        cx = c2 if c2.shape[0] == N else jnp.broadcast_to(c2, (N, n_h))
        # Streams are promoted to f32 in-kernel against the f32 W -> account
        # them at 4 B/elt regardless of input dtype.
        fixed = 2 * _block_phys_bytes(n_h, n_h, 4)                      # resident W, x2 buffers
        if tile_n is None:
            tile_n = _pick_tile_n(N, n_h, 4, n_streams=3,
                                  fixed_bytes=fixed, temp_f32_tiles=3)
        else:
            tile_n = _sanitize_tile(tile_n, N)
        grid = (pl.cdiv(N, tile_n),)
        vmem_limit = _vmem_limit_bytes(tile_n, n_h, 4, n_streams=3,
                                       fixed_bytes=fixed, temp_f32_tiles=3)

        out = pl.pallas_call(
            _disc_bilinear_kernel,
            out_shape=jax.ShapeDtypeStruct((2, N), jnp.float32),
            grid=grid,
            in_specs=[
                pl.BlockSpec(memory_space=pltpu.MemorySpace.SMEM),      # bias (1,)
                pl.BlockSpec((tile_n, n_h), lambda i: (i, 0)),          # h_pl tile
                pl.BlockSpec((tile_n, n_h), lambda i: (i, 0)),          # h_mi tile
                pl.BlockSpec((tile_n, n_h), lambda i: (i, 0)),          # c_x tile
                pl.BlockSpec((n_h, n_h), lambda i: (0, 0)),             # W (resident)
            ],
            out_specs=pl.BlockSpec((2, tile_n), lambda i: (0, i)),      # lane-dense
            compiler_params=pltpu.CompilerParams(
                dimension_semantics=("parallel",),
                vmem_limit_bytes=vmem_limit),
        )(b, h_pl, h_mi, cx, W)

    logits = out.T                                                      # (N, 2)

    # optional score biases (matches PyTorch's sc += s_bias)
    if s_bias1 is not None:
        logits = logits.at[:, 0:1].add(jnp.reshape(jnp.asarray(s_bias1, jnp.float32), (-1, 1)))
    if s_bias2 is not None:
        logits = logits.at[:, 1:2].add(jnp.reshape(jnp.asarray(s_bias2, jnp.float32), (-1, 1)))
    return logits


# ------------------------------------------------------------------ test glue

def _xavier_uniform(key, shape):
    # torch.nn.init.xavier_uniform_ on Bilinear weight (1, n_h, n_h):
    # fan_in = shape[1] * shape[2], fan_out = shape[0] * shape[2].
    fan_in = shape[1] * shape[2]
    fan_out = shape[0] * shape[2]
    a = (6.0 / (fan_in + fan_out)) ** 0.5
    return jax.random.uniform(key, shape, jnp.float32, minval=-a, maxval=a)


def _reference(c, h_pl, h_mi, weight, bias):
    N, n_h = h_pl.shape
    c_x = jnp.broadcast_to(jnp.reshape(c, (-1, n_h)), (N, n_h))
    W = weight.reshape(n_h, n_h)
    sc1 = jnp.einsum('ni,ij,nj->n', h_pl, W, c_x) + bias[0]
    sc2 = jnp.einsum('ni,ij,nj->n', h_mi, W, c_x) + bias[0]
    return jnp.stack([sc1, sc2], axis=1)


if __name__ == "__main__":
    key = jax.random.PRNGKey(0)
    k1, k2, k3, k4, k5, k6, k7, k8 = jax.random.split(key, 8)

    ATOL = RTOL = 5e-4

    # --- small shapes consistent with the module: 8 nodes, hidden dim 32 ----
    N, n_h = 8, 32
    h_pl = jax.random.normal(k1, (N, n_h), jnp.float32)
    h_mi = jax.random.normal(k2, (N, n_h), jnp.float32)
    c = jax.random.normal(k3, (1, n_h), jnp.float32)            # summary vector

    # deterministic parameter init (xavier_uniform weight, zero bias)
    weight = _xavier_uniform(k4, (1, n_h, n_h))
    bias = jnp.zeros((1,), jnp.float32)

    # fast path (the GraphST case: single summary row broadcast over N)
    logits = jax.block_until_ready(discriminator_forward(c, h_pl, h_mi, weight, bias))
    ref = _reference(c, h_pl, h_mi, weight, bias)
    assert logits.shape == (N, 2)
    assert jnp.allclose(logits, ref, atol=ATOL, rtol=RTOL), (logits, ref)

    # general path (c with N distinct rows) — full Bilinear semantics fallback
    c_full = jax.random.normal(k5, (N, n_h), jnp.float32)
    logits_g = jax.block_until_ready(discriminator_forward(c_full, h_pl, h_mi, weight, bias))
    ref_g = _reference(c_full, h_pl, h_mi, weight, bias)
    assert jnp.allclose(logits_g, ref_g, atol=ATOL, rtol=RTOL), (logits_g, ref_g)

    # ragged multi-block path (no wrapper padding, grid >= 2, partial last block)
    N2 = 300
    h_pl2 = jax.random.normal(k6, (N2, n_h), jnp.float32)
    h_mi2 = jax.random.normal(k7, (N2, n_h), jnp.float32)
    logits2 = jax.block_until_ready(discriminator_forward(c, h_pl2, h_mi2, weight, bias))
    ref2 = _reference(c, h_pl2, h_mi2, weight, bias)
    assert logits2.shape == (N2, 2)
    assert jnp.allclose(logits2, ref2, atol=ATOL, rtol=RTOL), (logits2, ref2)

    c_full2 = jax.random.normal(k8, (N2, n_h), jnp.float32)
    logits2_g = jax.block_until_ready(discriminator_forward(c_full2, h_pl2, h_mi2, weight, bias))
    ref2_g = _reference(c_full2, h_pl2, h_mi2, weight, bias)
    assert jnp.allclose(logits2_g, ref2_g, atol=ATOL, rtol=RTOL), (logits2_g, ref2_g)

    print("KERNEL_OK")
</pallas_src>

<mosaic_0001>
module attributes {stable_mosaic.version = 11 : i64} {
  func.func @_disc_gemv_kernel(%arg0: i32, %arg1: memref<1xf32, #tpu.memory_space<smem>>, %arg2: memref<8x32xf32, #tpu.memory_space<vmem>>, %arg3: memref<8x32xf32, #tpu.memory_space<vmem>>, %arg4: memref<8x32xf32, #tpu.memory_space<vmem>>, %arg5: memref<2x8xf32, #tpu.memory_space<vmem>>) attributes {dimension_semantics = [#tpu.dimension_semantics<parallel>], iteration_bounds = array<i64: 1>, scalar_prefetch = 0 : i64, scratch_operands = 0 : i64, tpu.core_type = #tpu.core_type<tc>, window_params = [{transform_indices = @transform_0, window_bounds = array<i64: 1>}, {pipeline_mode = #tpu.pipeline_mode<synchronous>, transform_indices = @transform_1, window_bounds = array<i64: 8, 32>}, {transform_indices = @transform_2, window_bounds = array<i64: 8, 32>}, {transform_indices = @transform_3, window_bounds = array<i64: 8, 32>}, {transform_indices = @transform_4, window_bounds = array<i64: 2, 8>}]} {
    %c0 = arith.constant 0 : index
    %0 = memref.load %arg1[%c0] : memref<1xf32, #tpu.memory_space<smem>>
    %c0_0 = arith.constant 0 : index
    %c0_1 = arith.constant 0 : index
    %1 = vector.load %arg2[%c0_0, %c0_1] : memref<8x32xf32, #tpu.memory_space<vmem>>, vector<8x32xf32>
    %c0_2 = arith.constant 0 : index
    %c0_3 = arith.constant 0 : index
    %2 = vector.load %arg3[%c0_2, %c0_3] : memref<8x32xf32, #tpu.memory_space<vmem>>, vector<8x32xf32>
    %cst = arith.constant dense<0.000000e+00> : vector<8x8xf32>
    %3 = tpu.matmul %1, %2, %cst {dimension_numbers = #tpu.dot_dimension_numbers<[1], [1], [0], [0], [0, 0, 1, 0], [], []>} : vector<8x32xf32>, vector<8x32xf32>, vector<8x8xf32> -> vector<8x8xf32>
    %c0_4 = arith.constant 0 : index
    %c0_5 = arith.constant 0 : index
    %4 = vector.load %arg4[%c0_4, %c0_5] : memref<8x32xf32, #tpu.memory_space<vmem>>, vector<8x32xf32>
    %cst_6 = arith.constant dense<0.000000e+00> : vector<8x8xf32>
    %5 = tpu.matmul %1, %4, %cst_6 {dimension_numbers = #tpu.dot_dimension_numbers<[1], [1], [0], [0], [0, 0, 1, 0], [], []>} : vector<8x32xf32>, vector<8x32xf32>, vector<8x8xf32> -> vector<8x8xf32>
    %6 = vector.extract_strided_slice %3 {offsets = [0, 0], sizes = [1, 8], strides = [1, 1]} : vector<8x8xf32> to vector<1x8xf32>
    %7 = vector.broadcast %0 : f32 to vector<1x8xf32>
    %8 = arith.addf %6, %7 : vector<1x8xf32>
    %c0_7 = arith.constant 0 : index
    %c0_8 = arith.constant 0 : index
    %9 = vector.load %arg5[%c0_7, %c0_8] : memref<2x8xf32, #tpu.memory_space<vmem>>, vector<1x8xf32>
    tpu.vector_store %arg5[%c0_7, %c0_8], %8 {strides = array<i32>} : memref<2x8xf32, #tpu.memory_space<vmem>>, vector<1x8xf32>,
    %10 = vector.extract_strided_slice %5 {offsets = [0, 0], sizes = [1, 8], strides = [1, 1]} : vector<8x8xf32> to vector<1x8xf32>
    %11 = vector.broadcast %0 : f32 to vector<1x8xf32>
    %12 = arith.addf %10, %11 : vector<1x8xf32>
    %c1 = arith.constant 1 : index
    %c0_9 = arith.constant 0 : index
    %13 = vector.load %arg5[%c1, %c0_9] : memref<2x8xf32, #tpu.memory_space<vmem>>, vector<1x8xf32>
    tpu.vector_store %arg5[%c1, %c0_9], %12 {strides = array<i32>} : memref<2x8xf32, #tpu.memory_space<vmem>>, vector<1x8xf32>,
    return
  }
  func.func @transform_0(%arg0: i32) -> i32 {
    %c0_i32 = arith.constant 0 : i32
    %c0_i32_0 = arith.constant 0 : i32
    return %c0_i32 : i32
  }
  func.func @transform_1(%arg0: i32) -> (i32, i32) {
    %c0_i32 = arith.constant 0 : i32
    %c0_i32_0 = arith.constant 0 : i32
    %c0_i32_1 = arith.constant 0 : i32
    return %c0_i32, %c0_i32_0 : i32, i32
  }
  func.func @transform_2(%arg0: i32) -> (i32, i32) {
    %c0_i32 = arith.constant 0 : i32
    %c0_i32_0 = arith.constant 0 : i32
    return %arg0, %c0_i32 : i32, i32
  }
  func.func @transform_3(%arg0: i32) -> (i32, i32) {
    %c0_i32 = arith.constant 0 : i32
    %c0_i32_0 = arith.constant 0 : i32
    return %arg0, %c0_i32 : i32, i32
  }
  func.func @transform_4(%arg0: i32) -> (i32, i32) {
    %c0_i32 = arith.constant 0 : i32
    %c0_i32_0 = arith.constant 0 : i32
    return %c0_i32, %arg0 : i32, i32
  }
}

</mosaic_0001>

<llo_original>
// kernel: tpu_custom_call.1
$region0: #{tpu_custom_call.1}
  #allocation0 [shape = 'u32[]', space=smem, size = 0x4, offset = 0x4, fixed_abs, tag = 'smem constant byte address 0x4 - core index']
  #allocation1 [shape = 'u32[144,128]{1,0:T(1,128)}', space=vmem, size = 0x12000, scoped, tag = 'internal scratch']
  #allocation2 [shape = 'f32[1]{0:T(128)S(6)}', space=smem, size = 0x200, scoped, tag = 'scoped memory for tpu_custom_call.1']
  %s0 = inlined_call_operand.<no memory space> [shape: f32[1], index: 0, kind: input, shape index: {}]
  %s1 = inlined_call_operand.hbm [shape: f32[8,32], index: 1, kind: input, shape index: {}]
  %s2 = inlined_call_operand.hbm [shape: f32[8,32], index: 2, kind: input, shape index: {}]
  %s3 = inlined_call_operand.vmem [shape: f32[8,32], index: 3, kind: input, shape index: {}]
  %s4 = inlined_call_operand.hbm [shape: f32[2,8], index: 4, kind: output, shape index: {}]
  %s5 = sld [smem:[#allocation0]]
  $region34: #{tpu_custom_call.1} parent=0
    _
  %s7 = ssub.s32 1, %s5
  %s8 = scalar_select 0, %s7, %s5
  %9 = sst [smem:[#allocation2]] %s0
  $region1: #{tpu_custom_call.1} parent=0
    #allocation3 [shape = 'u8[4096]{0}', space=vmem, size = 0x1000, scoped, tag = 'input window, operand 1, single buffered']
    #allocation4 [shape = 's32[1]{0}', space=sflag, size = 0x4, scoped, tag = 'scoped memory for tpu_custom_call.1']
    #allocation5 [shape = 's32[1]{0}', space=sflag, size = 0x4, scoped, tag = 'scoped memory for tpu_custom_call.1']
    #allocation6 [shape = 'u8[4096]{0}', space=vmem, size = 0x1000, scoped, tag = 'input window, operand 2, single buffered']
    #allocation7 [shape = 's32[1]{0}', space=sflag, size = 0x4, scoped, tag = 'scoped memory for tpu_custom_call.1']
    #allocation8 [shape = 'u8[1024]{0}', space=vmem, size = 0x400, scoped, tag = 'output window, operand 0, single buffered']
    %10 = vsyncpa [#allocation4], 0
    %11 = vsyncpa [#allocation7], 0
    %12 = vsyncpa [#allocation5], 0
    // Predicated region
    $region2: #{tpu_custom_call.1} parent=1 // pred_check
      _
    $region3: #{tpu_custom_call.1} parent=1 // pred_check_branch
      %14 = sbr.rel (0) target = $region5
    $region4: #{tpu_custom_call.1} parent=1 // pred_region
      _
    $region5: #{tpu_custom_call.1} parent=1 // pred_fallthru
      _
    // Predicated region
    $region6: #{tpu_custom_call.1} parent=1 // pred_check
      _
    $region7: #{tpu_custom_call.1} parent=1 // pred_check_branch
      %16 = sbr.rel (0) target = $region9
    $region8: #{tpu_custom_call.1} parent=1 // pred_region
      %s18 = ssub.s32 128, 128
      %19 = vsyncadd [#allocation4], %s18
      %s21 = sshll.u32 [#allocation3], 4
      %s22 = int_to_ptr.vmem [resolvable:$true] %s21
      %24 = dma.hbm_to_vmem [thread:$0]  %s1, 128, %s22, [#allocation4]
    $region9: #{tpu_custom_call.1} parent=1 // pred_fallthru
      _
    // Predicated region
    $region10: #{tpu_custom_call.1} parent=1 // pred_check
      _
    $region11: #{tpu_custom_call.1} parent=1 // pred_check_branch
      %26 = sbr.rel (0) target = $region13
    $region12: #{tpu_custom_call.1} parent=1 // pred_region
      %s28 = ssub.s32 128, 128
      %29 = vsyncadd [#allocation7], %s28
      %s31 = sshll.u32 [#allocation6], 4
      %s32 = int_to_ptr.vmem [resolvable:$true] %s31
      %34 = dma.hbm_to_vmem [thread:$0]  %s2, 128, %s32, [#allocation7]
    $region13: #{tpu_custom_call.1} parent=1 // pred_fallthru
      _
    // Predicated region
    $region14: #{tpu_custom_call.1} parent=1 // pred_check
      _
    $region15: #{tpu_custom_call.1} parent=1 // pred_check_branch
      %36 = sbr.rel (0) target = $region17
    $region16: #{tpu_custom_call.1} parent=1 // pred_region
      _
    $region17: #{tpu_custom_call.1} parent=1 // pred_fallthru
      _
    // Predicated region
    $region18: #{tpu_custom_call.1} parent=1 // pred_check
      _
    $region19: #{tpu_custom_call.1} parent=1 // pred_check_branch
      %38 = sbr.rel (0) target = $region21
    $region20: #{tpu_custom_call.1} parent=1 // pred_region
      %39 = dma.done [#allocation4], 128
    $region21: #{tpu_custom_call.1} parent=1 // pred_fallthru
      _
    // Predicated region
    $region22: #{tpu_custom_call.1} parent=1 // pred_check
      _
    $region23: #{tpu_custom_call.1} parent=1 // pred_check_branch
      %41 = sbr.rel (0) target = $region25
    $region24: #{tpu_custom_call.1} parent=1 // pred_region
      %42 = dma.done [#allocation7], 128
    $region25: #{tpu_custom_call.1} parent=1 // pred_fallthru
      _
    %s43 = sld [smem:[#allocation2]]
    %v44 = vld [vmem:[#allocation3] sm:$0xff]
    %v45 = vld [vmem:[#allocation6] sm:$0xff]
    %vm46 = vcmask 261120
    %v48 = vsel %vm46, %v44, 0
    %v51 = vsel %vm46, %v45, 0
    %53 = vmatprep.subr.mxu0 0.0
    %54 = vmatpush1.xpose.msra.mxu0 %v51
    %55 = vmatprep.subr.mxu0 0.0
    %56 = vmatpush1.xpose.msra.mxu0 0.0
    %57 = vmatprep.subr.mxu0 0.0
    %58 = vmatpush1.xpose.msra.mxu0 0.0
    %59 = vmatprep.subr.mxu0 0.0
    %60 = vmatpush1.xpose.msra.mxu0 0.0
    %61 = vmatprep.subr.mxu0 0.0
    %62 = vmatpush1.xpose.msra.mxu0 0.0
    %63 = vmatprep.subr.mxu0 0.0
    %64 = vmatpush1.xpose.msra.mxu0 0.0
    %65 = vmatprep.subr.mxu0 0.0
    %66 = vmatpush1.xpose.msra.mxu0 0.0
    %67 = vmatprep.subr.mxu0 0.0
    %68 = vmatpush1.xpose.msra.mxu0 0.0
    %69 = vmatprep.subr.mxu0 0.0
    %70 = vmatpush1.xpose.msra.mxu0 0.0
    %71 = vmatprep.subr.mxu0 0.0
    %72 = vmatpush1.xpose.msra.mxu0 0.0
    %73 = vmatprep.subr.mxu0 0.0
    %74 = vmatpush1.xpose.msra.mxu0 0.0
    %75 = vmatprep.subr.mxu0 0.0
    %76 = vmatpush1.xpose.msra.mxu0 0.0
    %77 = vmatprep.subr.mxu0 0.0
    %78 = vmatpush1.xpose.msra.mxu0 0.0
    %79 = vmatprep.subr.mxu0 0.0
    %80 = vmatpush1.xpose.msra.mxu0 0.0
    %81 = vmatprep.subr.mxu0 0.0
    %82 = vmatpush1.xpose.msra.mxu0 0.0
    %83 = vmatprep.subr.mxu0 0.0
    %84 = vmatpush1.xpose.msra.mxu0 0.0
    %85 = vmatprep.subr.mxu0 0.0
    %86 = vmatpush1.xpose.msra.mxu0 0.0
    %87 = vmatprep.subr.mxu0 0.0
    %88 = vmatpush1.xpose.msra.mxu0 0.0
    %89 = vmatprep.subr.mxu0 0.0
    %90 = vmatpush1.xpose.msra.mxu0 0.0
    %91 = vmatprep.subr.mxu0 0.0
    %92 = vmatpush1.xpose.msra.mxu0 0.0
    %93 = vmatprep.subr.mxu0 0.0
    %94 = vmatpush1.xpose.msra.mxu0 0.0
    %95 = vmatprep.subr.mxu0 0.0
    %96 = vmatpush1.xpose.msra.mxu0 0.0
    %97 = vmatprep.subr.mxu0 0.0
    %98 = vmatpush1.xpose.msra.mxu0 0.0
    %99 = vmatprep.subr.mxu0 0.0
    %100 = vmatpush1.xpose.msra.mxu0 0.0
    %101 = vmatprep.subr.mxu0 0.0
    %102 = vmatpush1.xpose.msra.mxu0 0.0
    %103 = vmatprep.subr.mxu0 0.0
    %104 = vmatpush1.xpose.msra.mxu0 0.0
    %105 = vmatprep.subr.mxu0 0.0
    %106 = vmatpush1.xpose.msra.mxu0 0.0
    %107 = vmatprep.subr.mxu0 0.0
    %108 = vmatpush1.xpose.msra.mxu0 0.0
    %109 = vmatprep.subr.mxu0 0.0
    %110 = vmatpush1.xpose.msra.mxu0 0.0
    %111 = vmatprep.subr.mxu0 0.0
    %112 = vmatpush1.xpose.msra.mxu0 0.0
    %113 = vmatprep.subr.mxu0 0.0
    %114 = vmatpush1.xpose.msra.mxu0 0.0
    %115 = vmatprep.subr.mxu0 0.0
    %116 = vmatpush1.xpose.msra.mxu0 0.0
    %117 = vmatprep.mubr.f32.mxu0 0.0
    %118 = vmatmul.mubr.f32.gmra.mrb[0].mxu0 %v48
    %v119 = vpop.f32.mrb[0].mxu0
    %v120 = vadd.f32 0.0, %v119
    %v121 = vpop.f32.mrb[0].mxu0
    %122 = vdwg.mxu0
    %v123 = vld [vmem:[%s3] sm:$0xff]
    %v125 = vsel %vm46, %v123, 0
    %127 = vmatprep.subr.mxu0 0.0
    %128 = vmatpush1.xpose.msra.mxu0 %v125
    %129 = vmatprep.subr.mxu0 0.0
    %130 = vmatpush1.xpose.msra.mxu0 0.0
    %131 = vmatprep.subr.mxu0 0.0
    %132 = vmatpush1.xpose.msra.mxu0 0.0
    %133 = vmatprep.subr.mxu0 0.0
    %134 = vmatpush1.xpose.msra.mxu0 0.0
    %135 = vmatprep.subr.mxu0 0.0
    %136 = vmatpush1.xpose.msra.mxu0 0.0
    %137 = vmatprep.subr.mxu0 0.0
    %138 = vmatpush1.xpose.msra.mxu0 0.0
    %139 = vmatprep.subr.mxu0 0.0
    %140 = vmatpush1.xpose.msra.mxu0 0.0
    %141 = vmatprep.subr.mxu0 0.0
    %142 = vmatpush1.xpose.msra.mxu0 0.0
    %143 = vmatprep.subr.mxu0 0.0
    %144 = vmatpush1.xpose.msra.mxu0 0.0
    %145 = vmatprep.subr.mxu0 0.0
    %146 = vmatpush1.xpose.msra.mxu0 0.0
    %147 = vmatprep.subr.mxu0 0.0
    %148 = vmatpush1.xpose.msra.mxu0 0.0
    %149 = vmatprep.subr.mxu0 0.0
    %150 = vmatpush1.xpose.msra.mxu0 0.0
    %151 = vmatprep.subr.mxu0 0.0
    %152 = vmatpush1.xpose.msra.mxu0 0.0
    %153 = vmatprep.subr.mxu0 0.0
    %154 = vmatpush1.xpose.msra.mxu0 0.0
    %155 = vmatprep.subr.mxu0 0.0
    %156 = vmatpush1.xpose.msra.mxu0 0.0
    %157 = vmatprep.subr.mxu0 0.0
    %158 = vmatpush1.xpose.msra.mxu0 0.0
    %159 = vmatprep.subr.mxu0 0.0
    %160 = vmatpush1.xpose.msra.mxu0 0.0
    %161 = vmatprep.subr.mxu0 0.0
    %162 = vmatpush1.xpose.msra.mxu0 0.0
    %163 = vmatprep.subr.mxu0 0.0
    %164 = vmatpush1.xpose.msra.mxu0 0.0
    %165 = vmatprep.subr.mxu0 0.0
    %166 = vmatpush1.xpose.msra.mxu0 0.0
    %167 = vmatprep.subr.mxu0 0.0
    %168 = vmatpush1.xpose.msra.mxu0 0.0
    %169 = vmatprep.subr.mxu0 0.0
    %170 = vmatpush1.xpose.msra.mxu0 0.0
    %171 = vmatprep.subr.mxu0 0.0
    %172 = vmatpush1.xpose.msra.mxu0 0.0
    %173 = vmatprep.subr.mxu0 0.0
    %174 = vmatpush1.xpose.msra.mxu0 0.0
    %175 = vmatprep.subr.mxu0 0.0
    %176 = vmatpush1.xpose.msra.mxu0 0.0
    %177 = vmatprep.subr.mxu0 0.0
    %178 = vmatpush1.xpose.msra.mxu0 0.0
    %179 = vmatprep.subr.mxu0 0.0
    %180 = vmatpush1.xpose.msra.mxu0 0.0
    %181 = vmatprep.subr.mxu0 0.0
    %182 = vmatpush1.xpose.msra.mxu0 0.0
    %183 = vmatprep.subr.mxu0 0.0
    %184 = vmatpush1.xpose.msra.mxu0 0.0
    %185 = vmatprep.subr.mxu0 0.0
    %186 = vmatpush1.xpose.msra.mxu0 0.0
    %187 = vmatprep.subr.mxu0 0.0
    %188 = vmatpush1.xpose.msra.mxu0 0.0
    %189 = vmatprep.subr.mxu0 0.0
    %190 = vmatpush1.xpose.msra.mxu0 0.0
    %191 = vmatprep.mubr.f32.mxu0 0.0
    %192 = vmatmul.mubr.f32.gmra.mrb[0].mxu0 %v48
    %v193 = vpop.f32.mrb[0].mxu0
    %v194 = vadd.f32 0.0, %v193
    %v195 = vpop.f32.mrb[0].mxu0
    %196 = vdwg.mxu0
    %v197 = vstv %s43
    %v198 = vadd.f32 %v120, %v197
    %vm199 = vcmask 57344
    %200 = vst.msk [vmem:[#allocation8] sm:$0x1] %vm199, %v198
    %v201 = vadd.f32 %v194, %v197
    %202 = vst.msk [vmem:[#allocation8 + $0x1] sm:$0x1] %vm199, %v201
    // Predicated region
    $region26: #{tpu_custom_call.1} parent=1 // pred_check
      _
    $region27: #{tpu_custom_call.1} parent=1 // pred_check_branch
      %204 = sbr.rel (0) target = $region29
    $region28: #{tpu_custom_call.1} parent=1 // pred_region
      %s206 = ssub.s32 32, 32
      %207 = vsyncadd [#allocation5], %s206
      %s209 = sshll.u32 [#allocation8], 4
      %s210 = int_to_ptr.vmem [resolvable:$true] %s209
      %212 = dma.vmem_to_hbm [thread:$0]  %s210, 32, %s4, [#allocation5]
    $region29: #{tpu_custom_call.1} parent=1 // pred_fallthru
      _
    // Predicated region
    $region30: #{tpu_custom_call.1} parent=1 // pred_check
      _
    $region31: #{tpu_custom_call.1} parent=1 // pred_check_branch
      %214 = sbr.rel (0) target = $region33
    $region32: #{tpu_custom_call.1} parent=1 // pred_region
      %215 = dma.done [#allocation5], 32
    $region33: #{tpu_custom_call.1} parent=1 // pred_fallthru
      _
    %216 = vsyncpa [#allocation4], 1
    %217 = vsyncpa [#allocation7], 1
    %218 = vsyncpa [#allocation5], 1

</llo_original>
